<compile_context>
chip_gen: v5e
topology: v5e:2x2
jax: 0.10.0
libtpu: 0.0.40
codegen_flags: <defaults>
</compile_context>

<pallas_src>
import jax
import jax.numpy as jnp
from jax import lax
from jax.experimental import pallas as pl
from jax.experimental.pallas import tpu as pltpu

# ----- model hyperparameters (small, consistent with the module) -----
VOCAB_SIZE = 16            # synthetic vocab (module derives it from data)
EMBEDDING_DIM = 64
HIDDEN_SIZE = 128
OUTPUT_SIZE = VOCAB_SIZE
BATCH = 2
SEQ_LEN = 8
SUBLANES_BF16 = 16         # pad batch to one full packed bf16 sublane group
LANES = 128                # lane-dense padding for vocab / output head


def rnn_kernel(tok_ref, embp_ref, whh_ref, wfc_ref, bfc_ref, out_ref):
    """out = fc(h_T),  h_t = tanh(x_t W_ih^T + b_ih + b_hh + h_{t-1} W_hh^T).

    tok_ref : (T*Bp, 1)    int32  time-major token ids (batch padded to Bp)
    embp_ref: (VPAD, H)    bf16   rows = emb_table @ W_ih^T + b_ih + b_hh
                                  (vocab rows padded with zeros to VPAD)
    whh_ref : (H, H)       bf16   (= W_hh^T)
    wfc_ref : (H, OPAD)    bf16   (= W_fc^T, cols zero-padded to OPAD)
    bfc_ref : (1, OPAD)    f32    (zero-padded)
    out_ref : (Bp, OPAD)   f32    lane-dense logits (sliced to (B, O) outside)
    """
    TB = tok_ref.shape[0]
    VPAD, H = embp_ref.shape
    Bp = out_ref.shape[0]
    T = TB // Bp

    # --- Fused embedding lookup + input projection + bias:
    # one-hot(token) @ (E @ W_ih^T + b).  Exact row selection (one-hot rows are
    # exact in bf16), accumulated in f32, one MXU matmul off the serial chain.
    iota = lax.broadcasted_iota(jnp.int32, (TB, VPAD), 1)
    onehot = (tok_ref[...] == iota).astype(jnp.bfloat16)          # (TB, VPAD)
    x_proj = jnp.dot(onehot, embp_ref[...],
                     preferred_element_type=jnp.float32)           # (TB, H) f32
    x_proj = x_proj.reshape(T, Bp, H)

    whh = whh_ref[...]                                             # bf16, loaded once

    # --- Fully unrolled recurrence (T static & small).  h_{-1} == 0, so step 0
    # skips its (dead) h @ W_hh matmul; each later step has exactly one
    # (Bp,H)x(H,H) bf16 MXU push on the serial dependence chain.
    h = jnp.tanh(x_proj[0])                                        # f32 carry
    for t in range(1, T):
        pre = x_proj[t] + jnp.dot(h.astype(jnp.bfloat16), whh,
                                  preferred_element_type=jnp.float32)
        h = jnp.tanh(pre)

    # --- Output head on the last hidden state only (matches out[:, -1, :]).
    # Lane-dense (OPAD=128) store -> unmasked vst.
    logits = (jnp.dot(h.astype(jnp.bfloat16), wfc_ref[...],
                      preferred_element_type=jnp.float32)
              + bfc_ref[...])
    out_ref[...] = logits.astype(out_ref.dtype)


@jax.jit
def rnn_forward(tokens, emb_table, w_ih, w_hh, b_ih, b_hh, w_fc, b_fc):
    """tokens: (B, T) int32.  Returns (B, OUTPUT_SIZE) float32."""
    B, T = tokens.shape
    V, E = emb_table.shape
    H = w_hh.shape[0]
    O = w_fc.shape[0]

    Bp = ((B + SUBLANES_BF16 - 1) // SUBLANES_BF16) * SUBLANES_BF16
    VPAD = ((V + LANES - 1) // LANES) * LANES
    OPAD = ((O + LANES - 1) // LANES) * LANES

    # Token prep (time-major, batch-padded with id 0; padded rows are junk and
    # sliced off).  All of this runs inside the single jitted program.
    tok_tm = jnp.transpose(tokens.astype(jnp.int32), (1, 0))        # (T, B)
    if Bp != B:
        tok_tm = jnp.pad(tok_tm, ((0, 0), (0, Bp - B)))             # (T, Bp)
    tok_flat = tok_tm.reshape(T * Bp, 1)                            # (T*Bp, 1)

    # Weight prep (constant-shaped, fused by XLA inside the jit):
    # pre-combine embedding @ W_ih^T with the summed bias -> one (V, H) table.
    bias = (b_ih + b_hh).astype(jnp.float32)
    embp = emb_table.astype(jnp.float32) @ jnp.transpose(w_ih).astype(jnp.float32)
    embp = embp + bias[None, :]                                     # (V, H) f32
    embp = jnp.pad(embp, ((0, VPAD - V), (0, 0))).astype(jnp.bfloat16)

    whh = jnp.transpose(w_hh).astype(jnp.bfloat16)                  # (H, H)
    wfc = jnp.pad(jnp.transpose(w_fc), ((0, 0), (0, OPAD - O))).astype(jnp.bfloat16)
    bfc = jnp.pad(b_fc.reshape(1, -1), ((0, 0), (0, OPAD - O))).astype(jnp.float32)

    cost = pl.CostEstimate(
        flops=(2 * T * Bp * VPAD * H            # fused one-hot projection
               + 2 * (T - 1) * Bp * H * H       # recurrence (t=0 skipped)
               + 2 * Bp * H * OPAD),            # output head
        transcendentals=T * Bp * H,
        bytes_accessed=(T * Bp * 4 + VPAD * H * 2 + H * H * 2
                        + H * OPAD * 2 + OPAD * 4 + Bp * OPAD * 4),
    )

    vmem_spec = pl.BlockSpec(memory_space=pltpu.MemorySpace.VMEM)

    # NOTE: no grid — everything (<0.2 MiB) is VMEM-resident; with a much
    # larger batch one would add a "parallel" batch grid axis (v7x 2 TCs).
    out_padded = pl.pallas_call(
        rnn_kernel,
        out_shape=jax.ShapeDtypeStruct((Bp, OPAD), jnp.float32),
        in_specs=[vmem_spec] * 5,
        out_specs=vmem_spec,
        cost_estimate=cost,
    )(tok_flat, embp, whh, wfc, bfc)

    return out_padded[:B, :O]


def reference_forward_f32(tokens, emb_table, w_ih, w_hh, b_ih, b_hh, w_fc, b_fc):
    """Pure-f32 reference (matches the PyTorch module semantics)."""
    x = jnp.take(emb_table, tokens, axis=0)                          # (B, T, E)
    B = tokens.shape[0]
    h = jnp.zeros((B, HIDDEN_SIZE), jnp.float32)
    for t in range(tokens.shape[1]):
        h = jnp.tanh(x[:, t, :] @ w_ih.T + b_ih + h @ w_hh.T + b_hh)
    return h @ w_fc.T + b_fc


def reference_forward_kernel_math(tokens, emb_table, w_ih, w_hh, b_ih, b_hh,
                                  w_fc, b_fc):
    """Reference mirroring the kernel's combined-projection / bf16-operand math."""
    B, T = tokens.shape
    embp = (emb_table @ w_ih.T + (b_ih + b_hh)).astype(jnp.bfloat16)  # (V, H)
    xproj = embp[tokens].astype(jnp.float32)                          # (B, T, H)
    whh = jnp.transpose(w_hh).astype(jnp.bfloat16)
    wfc = jnp.transpose(w_fc).astype(jnp.bfloat16)
    h = jnp.tanh(xproj[:, 0, :])
    for t in range(1, T):
        h = jnp.tanh(xproj[:, t, :] + jnp.dot(h.astype(jnp.bfloat16), whh,
                                              preferred_element_type=jnp.float32))
    return (jnp.dot(h.astype(jnp.bfloat16), wfc,
                    preferred_element_type=jnp.float32) + b_fc)


if __name__ == "__main__":
    key = jax.random.PRNGKey(0)
    ks = jax.random.split(key, 8)

    # Deterministic parameter init (PyTorch-like uniform ranges).
    bound = 1.0 / jnp.sqrt(HIDDEN_SIZE)
    emb_table = jax.random.normal(ks[0], (VOCAB_SIZE, EMBEDDING_DIM), jnp.float32)
    w_ih = jax.random.uniform(ks[1], (HIDDEN_SIZE, EMBEDDING_DIM), jnp.float32, -bound, bound)
    w_hh = jax.random.uniform(ks[2], (HIDDEN_SIZE, HIDDEN_SIZE), jnp.float32, -bound, bound)
    b_ih = jax.random.uniform(ks[3], (HIDDEN_SIZE,), jnp.float32, -bound, bound)
    b_hh = jax.random.uniform(ks[4], (HIDDEN_SIZE,), jnp.float32, -bound, bound)
    w_fc = jax.random.uniform(ks[5], (OUTPUT_SIZE, HIDDEN_SIZE), jnp.float32, -bound, bound)
    b_fc = jax.random.uniform(ks[6], (OUTPUT_SIZE,), jnp.float32, -bound, bound)

    tokens = jax.random.randint(ks[7], (BATCH, SEQ_LEN), 0, VOCAB_SIZE, jnp.int32)

    out = rnn_forward(tokens, emb_table, w_ih, w_hh, b_ih, b_hh, w_fc, b_fc)
    out = jax.block_until_ready(out)
    assert out.shape == (BATCH, OUTPUT_SIZE)

    # Tight check vs a reference with (near-)identical combined-projection /
    # bf16-operand / f32-accumulation math.
    ref_kernel = reference_forward_kernel_math(
        tokens, emb_table, w_ih, w_hh, b_ih, b_hh, w_fc, b_fc)
    assert jnp.allclose(out, ref_kernel, atol=2e-3, rtol=2e-3)

    # Looser check vs the pure-f32 module semantics (bf16 operand quantization).
    ref_f32 = reference_forward_f32(tokens, emb_table, w_ih, w_hh, b_ih, b_hh, w_fc, b_fc)
    assert jnp.allclose(out, ref_f32, atol=5e-2, rtol=5e-2)

    print("KERNEL_OK")
</pallas_src>

<mosaic_0001>
module attributes {stable_mosaic.version = 11 : i64} {
  func.func @rnn_kernel(%arg0: memref<128x1xi32, #tpu.memory_space<vmem>>, %arg1: memref<128x128xbf16, #tpu.memory_space<vmem>>, %arg2: memref<128x128xbf16, #tpu.memory_space<vmem>>, %arg3: memref<128x128xbf16, #tpu.memory_space<vmem>>, %arg4: memref<1x128xf32, #tpu.memory_space<vmem>>, %arg5: memref<16x128xf32, #tpu.memory_space<vmem>>) attributes {dimension_semantics = [], scalar_prefetch = 0 : i64, scratch_operands = 0 : i64, tpu.core_type = #tpu.core_type<tc>} {
    %0 = tpu.iota {dimensions = array<i32: 1>} : vector<128x128xi32>
    %c0 = arith.constant 0 : index
    %c0_0 = arith.constant 0 : index
    %1 = vector.load %arg0[%c0, %c0_0] : memref<128x1xi32, #tpu.memory_space<vmem>>, vector<128x1xi32>
    %2 = vector.broadcast %1 : vector<128x1xi32> to vector<128x128xi32>
    %3 = arith.cmpi eq, %2, %0 : vector<128x128xi32>
    %4 = arith.extui %3 : vector<128x128xi1> to vector<128x128xi32>
    %5 = arith.sitofp %4 : vector<128x128xi32> to vector<128x128xf32>
    %6 = arith.truncf %5 : vector<128x128xf32> to vector<128x128xbf16>
    %c0_1 = arith.constant 0 : index
    %c0_2 = arith.constant 0 : index
    %7 = vector.load %arg1[%c0_1, %c0_2] : memref<128x128xbf16, #tpu.memory_space<vmem>>, vector<128x128xbf16>
    %cst = arith.constant dense<0.000000e+00> : vector<128x128xf32>
    %8 = tpu.matmul %6, %7, %cst {dimension_numbers = #tpu.dot_dimension_numbers<[1], [0], [0], [1], [0, 0, 1, 1], [], []>} : vector<128x128xbf16>, vector<128x128xbf16>, vector<128x128xf32> -> vector<128x128xf32>
    %9 = vector.shape_cast %8 : vector<128x128xf32> to vector<8x16x128xf32>
    %c0_3 = arith.constant 0 : index
    %c0_4 = arith.constant 0 : index
    %10 = vector.load %arg2[%c0_3, %c0_4] : memref<128x128xbf16, #tpu.memory_space<vmem>>, vector<128x128xbf16>
    %11 = vector.extract_strided_slice %9 {offsets = [0, 0, 0], sizes = [1, 16, 128], strides = [1, 1, 1]} : vector<8x16x128xf32> to vector<1x16x128xf32>
    %12 = vector.shape_cast %11 : vector<1x16x128xf32> to vector<16x128xf32>
    %13 = math.tanh %12 : vector<16x128xf32>
    %14 = vector.extract_strided_slice %9 {offsets = [1, 0, 0], sizes = [1, 16, 128], strides = [1, 1, 1]} : vector<8x16x128xf32> to vector<1x16x128xf32>
    %15 = vector.shape_cast %14 : vector<1x16x128xf32> to vector<16x128xf32>
    %16 = arith.truncf %13 : vector<16x128xf32> to vector<16x128xbf16>
    %cst_5 = arith.constant dense<0.000000e+00> : vector<16x128xf32>
    %17 = tpu.matmul %16, %10, %cst_5 {dimension_numbers = #tpu.dot_dimension_numbers<[1], [0], [0], [1], [0, 0, 1, 1], [], []>} : vector<16x128xbf16>, vector<128x128xbf16>, vector<16x128xf32> -> vector<16x128xf32>
    %18 = arith.addf %15, %17 : vector<16x128xf32>
    %19 = math.tanh %18 : vector<16x128xf32>
    %20 = vector.extract_strided_slice %9 {offsets = [2, 0, 0], sizes = [1, 16, 128], strides = [1, 1, 1]} : vector<8x16x128xf32> to vector<1x16x128xf32>
    %21 = vector.shape_cast %20 : vector<1x16x128xf32> to vector<16x128xf32>
    %22 = arith.truncf %19 : vector<16x128xf32> to vector<16x128xbf16>
    %cst_6 = arith.constant dense<0.000000e+00> : vector<16x128xf32>
    %23 = tpu.matmul %22, %10, %cst_6 {dimension_numbers = #tpu.dot_dimension_numbers<[1], [0], [0], [1], [0, 0, 1, 1], [], []>} : vector<16x128xbf16>, vector<128x128xbf16>, vector<16x128xf32> -> vector<16x128xf32>
    %24 = arith.addf %21, %23 : vector<16x128xf32>
    %25 = math.tanh %24 : vector<16x128xf32>
    %26 = vector.extract_strided_slice %9 {offsets = [3, 0, 0], sizes = [1, 16, 128], strides = [1, 1, 1]} : vector<8x16x128xf32> to vector<1x16x128xf32>
    %27 = vector.shape_cast %26 : vector<1x16x128xf32> to vector<16x128xf32>
    %28 = arith.truncf %25 : vector<16x128xf32> to vector<16x128xbf16>
    %cst_7 = arith.constant dense<0.000000e+00> : vector<16x128xf32>
    %29 = tpu.matmul %28, %10, %cst_7 {dimension_numbers = #tpu.dot_dimension_numbers<[1], [0], [0], [1], [0, 0, 1, 1], [], []>} : vector<16x128xbf16>, vector<128x128xbf16>, vector<16x128xf32> -> vector<16x128xf32>
    %30 = arith.addf %27, %29 : vector<16x128xf32>
    %31 = math.tanh %30 : vector<16x128xf32>
    %32 = vector.extract_strided_slice %9 {offsets = [4, 0, 0], sizes = [1, 16, 128], strides = [1, 1, 1]} : vector<8x16x128xf32> to vector<1x16x128xf32>
    %33 = vector.shape_cast %32 : vector<1x16x128xf32> to vector<16x128xf32>
    %34 = arith.truncf %31 : vector<16x128xf32> to vector<16x128xbf16>
    %cst_8 = arith.constant dense<0.000000e+00> : vector<16x128xf32>
    %35 = tpu.matmul %34, %10, %cst_8 {dimension_numbers = #tpu.dot_dimension_numbers<[1], [0], [0], [1], [0, 0, 1, 1], [], []>} : vector<16x128xbf16>, vector<128x128xbf16>, vector<16x128xf32> -> vector<16x128xf32>
    %36 = arith.addf %33, %35 : vector<16x128xf32>
    %37 = math.tanh %36 : vector<16x128xf32>
    %38 = vector.extract_strided_slice %9 {offsets = [5, 0, 0], sizes = [1, 16, 128], strides = [1, 1, 1]} : vector<8x16x128xf32> to vector<1x16x128xf32>
    %39 = vector.shape_cast %38 : vector<1x16x128xf32> to vector<16x128xf32>
    %40 = arith.truncf %37 : vector<16x128xf32> to vector<16x128xbf16>
    %cst_9 = arith.constant dense<0.000000e+00> : vector<16x128xf32>
    %41 = tpu.matmul %40, %10, %cst_9 {dimension_numbers = #tpu.dot_dimension_numbers<[1], [0], [0], [1], [0, 0, 1, 1], [], []>} : vector<16x128xbf16>, vector<128x128xbf16>, vector<16x128xf32> -> vector<16x128xf32>
    %42 = arith.addf %39, %41 : vector<16x128xf32>
    %43 = math.tanh %42 : vector<16x128xf32>
    %44 = vector.extract_strided_slice %9 {offsets = [6, 0, 0], sizes = [1, 16, 128], strides = [1, 1, 1]} : vector<8x16x128xf32> to vector<1x16x128xf32>
    %45 = vector.shape_cast %44 : vector<1x16x128xf32> to vector<16x128xf32>
    %46 = arith.truncf %43 : vector<16x128xf32> to vector<16x128xbf16>
    %cst_10 = arith.constant dense<0.000000e+00> : vector<16x128xf32>
    %47 = tpu.matmul %46, %10, %cst_10 {dimension_numbers = #tpu.dot_dimension_numbers<[1], [0], [0], [1], [0, 0, 1, 1], [], []>} : vector<16x128xbf16>, vector<128x128xbf16>, vector<16x128xf32> -> vector<16x128xf32>
    %48 = arith.addf %45, %47 : vector<16x128xf32>
    %49 = math.tanh %48 : vector<16x128xf32>
    %50 = vector.extract_strided_slice %9 {offsets = [7, 0, 0], sizes = [1, 16, 128], strides = [1, 1, 1]} : vector<8x16x128xf32> to vector<1x16x128xf32>
    %51 = vector.shape_cast %50 : vector<1x16x128xf32> to vector<16x128xf32>
    %52 = arith.truncf %49 : vector<16x128xf32> to vector<16x128xbf16>
    %cst_11 = arith.constant dense<0.000000e+00> : vector<16x128xf32>
    %53 = tpu.matmul %52, %10, %cst_11 {dimension_numbers = #tpu.dot_dimension_numbers<[1], [0], [0], [1], [0, 0, 1, 1], [], []>} : vector<16x128xbf16>, vector<128x128xbf16>, vector<16x128xf32> -> vector<16x128xf32>
    %54 = arith.addf %51, %53 : vector<16x128xf32>
    %55 = math.tanh %54 : vector<16x128xf32>
    %56 = arith.truncf %55 : vector<16x128xf32> to vector<16x128xbf16>
    %c0_12 = arith.constant 0 : index
    %c0_13 = arith.constant 0 : index
    %57 = vector.load %arg3[%c0_12, %c0_13] : memref<128x128xbf16, #tpu.memory_space<vmem>>, vector<128x128xbf16>
    %cst_14 = arith.constant dense<0.000000e+00> : vector<16x128xf32>
    %58 = tpu.matmul %56, %57, %cst_14 {dimension_numbers = #tpu.dot_dimension_numbers<[1], [0], [0], [1], [0, 0, 1, 1], [], []>} : vector<16x128xbf16>, vector<128x128xbf16>, vector<16x128xf32> -> vector<16x128xf32>
    %c0_15 = arith.constant 0 : index
    %c0_16 = arith.constant 0 : index
    %59 = vector.load %arg4[%c0_15, %c0_16] : memref<1x128xf32, #tpu.memory_space<vmem>>, vector<1x128xf32>
    %60 = vector.broadcast %59 : vector<1x128xf32> to vector<16x128xf32>
    %61 = arith.addf %58, %60 : vector<16x128xf32>
    %c0_17 = arith.constant 0 : index
    %c0_18 = arith.constant 0 : index
    %62 = vector.load %arg5[%c0_17, %c0_18] : memref<16x128xf32, #tpu.memory_space<vmem>>, vector<16x128xf32>
    tpu.vector_store %arg5[%c0_17, %c0_18], %61 {strides = array<i32>} : memref<16x128xf32, #tpu.memory_space<vmem>>, vector<16x128xf32>,
    return
  }
}

</mosaic_0001>

<llo_original>
// kernel: rnn_forward.1
$region0: #{rnn_forward.1}
  #allocation0 [shape = 'u32[]', space=smem, size = 0x4, offset = 0x4, fixed_abs, tag = 'smem constant byte address 0x4 - core index']
  #allocation1 [shape = 'u32[72,128]{1,0:T(1,128)}', space=vmem, size = 0x9000, scoped, tag = 'internal scratch']
  %s0 = inlined_call_operand.vmem [shape: s32[128,1], index: 0, kind: input, shape index: {}]
  %s1 = inlined_call_operand.vmem [shape: bf16[128,128], index: 1, kind: input, shape index: {}]
  %s2 = inlined_call_operand.vmem [shape: bf16[128,128], index: 2, kind: input, shape index: {}]
  %s3 = inlined_call_operand.vmem [shape: bf16[128,128], index: 3, kind: input, shape index: {}]
  %s4 = inlined_call_operand.vmem [shape: f32[1,128], index: 4, kind: input, shape index: {}]
  %s5 = inlined_call_operand.vmem [shape: f32[16,128], index: 5, kind: output, shape index: {}]
  %s6 = sld [smem:[#allocation0]]
  $region30: #{rnn_forward.1} parent=0
    _
  %s8 = ssub.s32 1, %s6
  %s9 = scalar_select 0, %s8, %s6
  // Predicated region
  $region2: #{rnn_forward.1} parent=0 // pred_check
    _
  $region3: #{rnn_forward.1} parent=0 // pred_check_branch
    %11 = sbr.rel (0) target = $region5
  $region4: #{rnn_forward.1} parent=0 // pred_region
    _
  $region5: #{rnn_forward.1} parent=0 // pred_fallthru
    _
  // Predicated region
  $region6: #{rnn_forward.1} parent=0 // pred_check
    _
  $region7: #{rnn_forward.1} parent=0 // pred_check_branch
    %13 = sbr.rel (0) target = $region9
  $region8: #{rnn_forward.1} parent=0 // pred_region
    _
  $region9: #{rnn_forward.1} parent=0 // pred_fallthru
    _
  // Predicated region
  $region10: #{rnn_forward.1} parent=0 // pred_check
    _
  $region11: #{rnn_forward.1} parent=0 // pred_check_branch
    %15 = sbr.rel (0) target = $region13
  $region12: #{rnn_forward.1} parent=0 // pred_region
    _
  $region13: #{rnn_forward.1} parent=0 // pred_fallthru
    _
  // Predicated region
  $region14: #{rnn_forward.1} parent=0 // pred_check
    _
  $region15: #{rnn_forward.1} parent=0 // pred_check_branch
    %17 = sbr.rel (0) target = $region17
  $region16: #{rnn_forward.1} parent=0 // pred_region
    _
  $region17: #{rnn_forward.1} parent=0 // pred_fallthru
    _
  // Predicated region
  $region18: #{rnn_forward.1} parent=0 // pred_check
    _
  $region19: #{rnn_forward.1} parent=0 // pred_check_branch
    %19 = sbr.rel (0) target = $region21
  $region20: #{rnn_forward.1} parent=0 // pred_region
    _
  $region21: #{rnn_forward.1} parent=0 // pred_fallthru
    _
  %v20 = vlaneseq
  %v21 = vand.u32 %v20, 127
  %v22 = vld [vmem:[%s0] sm:$0xff]
  %v23 = vld [vmem:[%s0 + $0x8] sm:$0xff]
  %v24 = vld [vmem:[%s0 + $0x10] sm:$0xff]
  %v25 = vld [vmem:[%s0 + $0x18] sm:$0xff]
  %v26 = vld [vmem:[%s0 + $0x20] sm:$0xff]
  %v27 = vld [vmem:[%s0 + $0x28] sm:$0xff]
  %v28 = vld [vmem:[%s0 + $0x30] sm:$0xff]
  %v29 = vld [vmem:[%s0 + $0x38] sm:$0xff]
  %v30 = vld [vmem:[%s0 + $0x40] sm:$0xff]
  %v31 = vld [vmem:[%s0 + $0x48] sm:$0xff]
  %v32 = vld [vmem:[%s0 + $0x50] sm:$0xff]
  %v33 = vld [vmem:[%s0 + $0x58] sm:$0xff]
  %v34 = vld [vmem:[%s0 + $0x60] sm:$0xff]
  %v35 = vld [vmem:[%s0 + $0x68] sm:$0xff]
  %v36 = vld [vmem:[%s0 + $0x70] sm:$0xff]
  %v37 = vld [vmem:[%s0 + $0x78] sm:$0xff]
  %38 = vset.pattern.permute.xlu0 0
  %39 = vperm.xlu0 %38, %v22
  %v40 = vpop.permute.xlu0 %39
  %41 = vset.pattern.permute.xlu0 0
  %42 = vperm.xlu0 %41, %v23
  %v43 = vpop.permute.xlu0 %42
  %44 = vset.pattern.permute.xlu0 0
  %45 = vperm.xlu0 %44, %v24
  %v46 = vpop.permute.xlu0 %45
  %47 = vset.pattern.permute.xlu0 0
  %48 = vperm.xlu0 %47, %v25
  %v49 = vpop.permute.xlu0 %48
  %50 = vset.pattern.permute.xlu0 0
  %51 = vperm.xlu0 %50, %v26
  %v52 = vpop.permute.xlu0 %51
  %53 = vset.pattern.permute.xlu0 0
  %54 = vperm.xlu0 %53, %v27
  %v55 = vpop.permute.xlu0 %54
  %56 = vset.pattern.permute.xlu0 0
  %57 = vperm.xlu0 %56, %v28
  %v58 = vpop.permute.xlu0 %57
  %59 = vset.pattern.permute.xlu0 0
  %60 = vperm.xlu0 %59, %v29
  %v61 = vpop.permute.xlu0 %60
  %62 = vset.pattern.permute.xlu0 0
  %63 = vperm.xlu0 %62, %v30
  %v64 = vpop.permute.xlu0 %63
  %65 = vset.pattern.permute.xlu0 0
  %66 = vperm.xlu0 %65, %v31
  %v67 = vpop.permute.xlu0 %66
  %68 = vset.pattern.permute.xlu0 0
  %69 = vperm.xlu0 %68, %v32
  %v70 = vpop.permute.xlu0 %69
  %71 = vset.pattern.permute.xlu0 0
  %72 = vperm.xlu0 %71, %v33
  %v73 = vpop.permute.xlu0 %72
  %74 = vset.pattern.permute.xlu0 0
  %75 = vperm.xlu0 %74, %v34
  %v76 = vpop.permute.xlu0 %75
  %77 = vset.pattern.permute.xlu0 0
  %78 = vperm.xlu0 %77, %v35
  %v79 = vpop.permute.xlu0 %78
  %80 = vset.pattern.permute.xlu0 0
  %81 = vperm.xlu0 %80, %v36
  %v82 = vpop.permute.xlu0 %81
  %83 = vset.pattern.permute.xlu0 0
  %84 = vperm.xlu0 %83, %v37
  %v85 = vpop.permute.xlu0 %84
  %vm86 = vcmp.eq.s32.totalorder %v40, %v21
  %vm87 = vcmp.eq.s32.totalorder %v43, %v21
  %vm88 = vcmp.eq.s32.totalorder %v46, %v21
  %vm89 = vcmp.eq.s32.totalorder %v49, %v21
  %vm90 = vcmp.eq.s32.totalorder %v52, %v21
  %vm91 = vcmp.eq.s32.totalorder %v55, %v21
  %vm92 = vcmp.eq.s32.totalorder %v58, %v21
  %vm93 = vcmp.eq.s32.totalorder %v61, %v21
  %vm94 = vcmp.eq.s32.totalorder %v64, %v21
  %vm95 = vcmp.eq.s32.totalorder %v67, %v21
  %vm96 = vcmp.eq.s32.totalorder %v70, %v21
  %vm97 = vcmp.eq.s32.totalorder %v73, %v21
  %vm98 = vcmp.eq.s32.totalorder %v76, %v21
  %vm99 = vcmp.eq.s32.totalorder %v79, %v21
  %vm100 = vcmp.eq.s32.totalorder %v82, %v21
  %vm101 = vcmp.eq.s32.totalorder %v85, %v21
  %v102 = vsel %vm86, 1, 0
  %v103 = vsel %vm87, 1, 0
  %v104 = vsel %vm88, 1, 0
  %v105 = vsel %vm89, 1, 0
  %v106 = vsel %vm90, 1, 0
  %v107 = vsel %vm91, 1, 0
  %v108 = vsel %vm92, 1, 0
  %v109 = vsel %vm93, 1, 0
  %v110 = vsel %vm94, 1, 0
  %v111 = vsel %vm95, 1, 0
  %v112 = vsel %vm96, 1, 0
  %v113 = vsel %vm97, 1, 0
  %v114 = vsel %vm98, 1, 0
  %v115 = vsel %vm99, 1, 0
  %v116 = vsel %vm100, 1, 0
  %v117 = vsel %vm101, 1, 0
  %v118 = vcvt.s32.f32 %v102
  %v119 = vcvt.s32.f32 %v103
  %v120 = vcvt.s32.f32 %v104
  %v121 = vcvt.s32.f32 %v105
  %v122 = vcvt.s32.f32 %v106
  %v123 = vcvt.s32.f32 %v107
  %v124 = vcvt.s32.f32 %v108
  %v125 = vcvt.s32.f32 %v109
  %v126 = vcvt.s32.f32 %v110
  %v127 = vcvt.s32.f32 %v111
  %v128 = vcvt.s32.f32 %v112
  %v129 = vcvt.s32.f32 %v113
  %v130 = vcvt.s32.f32 %v114
  %v131 = vcvt.s32.f32 %v115
  %v132 = vcvt.s32.f32 %v116
  %v133 = vcvt.s32.f32 %v117
  %v134 = vpack.c.bf16 %v119, %v118
  %v135 = vpack.c.bf16 %v121, %v120
  %v136 = vpack.c.bf16 %v123, %v122
  %v137 = vpack.c.bf16 %v125, %v124
  %v138 = vpack.c.bf16 %v127, %v126
  %v139 = vpack.c.bf16 %v129, %v128
  %v140 = vpack.c.bf16 %v131, %v130
  %v141 = vpack.c.bf16 %v133, %v132
  %v142 = vld [vmem:[%s1] sm:$0xf]
  %v143 = vld [vmem:[%s1 + $0x4] sm:$0xf]
  %v144 = vld [vmem:[%s1 + $0x8] sm:$0xf]
  %v145 = vld [vmem:[%s1 + $0xc] sm:$0xf]
  %v146 = vld [vmem:[%s1 + $0x10] sm:$0xf]
  %v147 = vld [vmem:[%s1 + $0x14] sm:$0xf]
  %v148 = vld [vmem:[%s1 + $0x18] sm:$0xf]
  %v149 = vld [vmem:[%s1 + $0x1c] sm:$0xf]
  %v150 = vld [vmem:[%s1 + $0x20] sm:$0xf]
  %v151 = vld [vmem:[%s1 + $0x24] sm:$0xf]
  %v152 = vld [vmem:[%s1 + $0x28] sm:$0xf]
  %v153 = vld [vmem:[%s1 + $0x2c] sm:$0xf]
  %v154 = vld [vmem:[%s1 + $0x30] sm:$0xf]
  %v155 = vld [vmem:[%s1 + $0x34] sm:$0xf]
  %v156 = vld [vmem:[%s1 + $0x38] sm:$0xf]
  %v157 = vld [vmem:[%s1 + $0x3c] sm:$0xf]
  %v174 = vunpack.c.l.b16 %v142
  %v175 = vunpack.c.l.b16 %v143
  %v176 = vunpack.c.l.b16 %v144
  %v177 = vunpack.c.l.b16 %v145
  %v178 = vunpack.c.l.b16 %v146
  %v179 = vunpack.c.l.b16 %v147
  %v180 = vunpack.c.l.b16 %v148
  %v181 = vunpack.c.l.b16 %v149
  %v182 = vunpack.c.l.b16 %v150
  %v183 = vunpack.c.l.b16 %v151
  %v184 = vunpack.c.l.b16 %v152
  %v185 = vunpack.c.l.b16 %v153
  %v186 = vunpack.c.l.b16 %v154
  %v187 = vunpack.c.l.b16 %v155
  %v188 = vunpack.c.l.b16 %v156
  %v189 = vunpack.c.l.b16 %v157
  %v190 = vpack.c.b16 %v175, %v174
  %v191 = vpack.c.b16 %v177, %v176
  %v192 = vpack.c.b16 %v179, %v178
  %v193 = vpack.c.b16 %v181, %v180
  %v194 = vpack.c.b16 %v183, %v182
  %v195 = vpack.c.b16 %v185, %v184
  %v196 = vpack.c.b16 %v187, %v186
  %v197 = vpack.c.b16 %v189, %v188
  %206 = vmatpush.bf16.msra.mxu0 %v197
  %207 = vmatpush.bf16.msra.mxu0 %v196
  %208 = vmatpush.bf16.msra.mxu0 %v195
  %209 = vmatpush.bf16.msra.mxu0 %v194
  %210 = vmatpush.bf16.msra.mxu0 %v193
  %211 = vmatpush.bf16.msra.mxu0 %v192
  %212 = vmatpush.bf16.msra.mxu0 %v191
  %213 = vmatpush.bf16.msra.mxu0 %v190
  %214 = vmatmul.bf16.gmra.mxu0 %v134
  %v215 = vpop.f32.mrf.mxu0
  %v216 = vadd.f32 0.0, %v215
  %v217 = vpop.f32.mrf.mxu0
  %v218 = vadd.f32 0.0, %v217
  %219 = vmatmul.bf16.gmra.mxu0 %v135
  %v220 = vpop.f32.mrf.mxu0
  %v221 = vadd.f32 0.0, %v220
  %v222 = vpop.f32.mrf.mxu0
  %v223 = vadd.f32 0.0, %v222
  %224 = vmatmul.bf16.gmra.mxu0 %v136
  %v225 = vpop.f32.mrf.mxu0
  %v226 = vadd.f32 0.0, %v225
  %v227 = vpop.f32.mrf.mxu0
  %v228 = vadd.f32 0.0, %v227
  %229 = vmatmul.bf16.gmra.mxu0 %v137
  %v230 = vpop.f32.mrf.mxu0
  %v231 = vadd.f32 0.0, %v230
  %v232 = vpop.f32.mrf.mxu0
  %v233 = vadd.f32 0.0, %v232
  %234 = vmatmul.bf16.gmra.mxu0 %v138
  %v235 = vpop.f32.mrf.mxu0
  %v236 = vadd.f32 0.0, %v235
  %v237 = vpop.f32.mrf.mxu0
  %v238 = vadd.f32 0.0, %v237
  %239 = vmatmul.bf16.gmra.mxu0 %v139
  %v240 = vpop.f32.mrf.mxu0
  %v241 = vadd.f32 0.0, %v240
  %v242 = vpop.f32.mrf.mxu0
  %v243 = vadd.f32 0.0, %v242
  %244 = vmatmul.bf16.gmra.mxu0 %v140
  %v245 = vpop.f32.mrf.mxu0
  %v246 = vadd.f32 0.0, %v245
  %v247 = vpop.f32.mrf.mxu0
  %v248 = vadd.f32 0.0, %v247
  %249 = vmatmul.bf16.gmra.mxu0 %v141
  %v250 = vpop.f32.mrf.mxu0
  %v251 = vadd.f32 0.0, %v250
  %v252 = vpop.f32.mrf.mxu0
  %v253 = vadd.f32 0.0, %v252
  %254 = vdwg.mxu0
  %v255 = vld [vmem:[%s2] sm:$0xf]
  %v256 = vld [vmem:[%s2 + $0x4] sm:$0xf]
  %v257 = vld [vmem:[%s2 + $0x8] sm:$0xf]
  %v258 = vld [vmem:[%s2 + $0xc] sm:$0xf]
  %v259 = vld [vmem:[%s2 + $0x10] sm:$0xf]
  %v260 = vld [vmem:[%s2 + $0x14] sm:$0xf]
  %v261 = vld [vmem:[%s2 + $0x18] sm:$0xf]
  %v262 = vld [vmem:[%s2 + $0x1c] sm:$0xf]
  %v263 = vld [vmem:[%s2 + $0x20] sm:$0xf]
  %v264 = vld [vmem:[%s2 + $0x24] sm:$0xf]
  %v265 = vld [vmem:[%s2 + $0x28] sm:$0xf]
  %v266 = vld [vmem:[%s2 + $0x2c] sm:$0xf]
  %v267 = vld [vmem:[%s2 + $0x30] sm:$0xf]
  %v268 = vld [vmem:[%s2 + $0x34] sm:$0xf]
  %v269 = vld [vmem:[%s2 + $0x38] sm:$0xf]
  %v270 = vld [vmem:[%s2 + $0x3c] sm:$0xf]
  %v271 = vtanh.pop %v216
  %v272 = vtanh.pop %v218
  %v273 = vpack.c.bf16 %v272, %v271
  %v290 = vunpack.c.l.b16 %v255
  %v291 = vunpack.c.l.b16 %v256
  %v292 = vunpack.c.l.b16 %v257
  %v293 = vunpack.c.l.b16 %v258
  %v294 = vunpack.c.l.b16 %v259
  %v295 = vunpack.c.l.b16 %v260
  %v296 = vunpack.c.l.b16 %v261
  %v297 = vunpack.c.l.b16 %v262
  %v298 = vunpack.c.l.b16 %v263
  %v299 = vunpack.c.l.b16 %v264
  %v300 = vunpack.c.l.b16 %v265
  %v301 = vunpack.c.l.b16 %v266
  %v302 = vunpack.c.l.b16 %v267
  %v303 = vunpack.c.l.b16 %v268
  %v304 = vunpack.c.l.b16 %v269
  %v305 = vunpack.c.l.b16 %v270
  %v306 = vpack.c.b16 %v291, %v290
  %v307 = vpack.c.b16 %v293, %v292
  %v308 = vpack.c.b16 %v295, %v294
  %v309 = vpack.c.b16 %v297, %v296
  %v310 = vpack.c.b16 %v299, %v298
  %v311 = vpack.c.b16 %v301, %v300
  %v312 = vpack.c.b16 %v303, %v302
  %v313 = vpack.c.b16 %v305, %v304
  %322 = vmatpush.bf16.msra.mxu0 %v313
  %323 = vmatpush.bf16.msra.mxu0 %v312
  %324 = vmatpush.bf16.msra.mxu0 %v311
  %325 = vmatpush.bf16.msra.mxu0 %v310
  %326 = vmatpush.bf16.msra.mxu0 %v309
  %327 = vmatpush.bf16.msra.mxu0 %v308
  %328 = vmatpush.bf16.msra.mxu0 %v307
  %329 = vmatpush.bf16.msra.mxu0 %v306
  %330 = vmatmul.bf16.gmra.mxu0 %v273
  %v331 = vpop.f32.mrf.mxu0
  %v332 = vadd.f32 0.0, %v331
  %v333 = vpop.f32.mrf.mxu0
  %v334 = vadd.f32 0.0, %v333
  %335 = vdwg.mxu0
  %v336 = vadd.f32 %v221, %v332
  %v337 = vadd.f32 %v223, %v334
  %v338 = vtanh.pop %v336
  %v339 = vtanh.pop %v337
  %v340 = vpack.c.bf16 %v339, %v338
  %341 = vmatpush.bf16.msra.mxu0 %v313
  %342 = vmatpush.bf16.msra.mxu0 %v312
  %343 = vmatpush.bf16.msra.mxu0 %v311
  %344 = vmatpush.bf16.msra.mxu0 %v310
  %345 = vmatpush.bf16.msra.mxu0 %v309
  %346 = vmatpush.bf16.msra.mxu0 %v308
  %347 = vmatpush.bf16.msra.mxu0 %v307
  %348 = vmatpush.bf16.msra.mxu0 %v306
  %349 = vmatmul.bf16.gmra.mxu0 %v340
  %v350 = vpop.f32.mrf.mxu0
  %v351 = vadd.f32 0.0, %v350
  %v352 = vpop.f32.mrf.mxu0
  %v353 = vadd.f32 0.0, %v352
  %354 = vdwg.mxu0
  %v355 = vadd.f32 %v226, %v351
  %v356 = vadd.f32 %v228, %v353
  %v357 = vtanh.pop %v355
  %v358 = vtanh.pop %v356
  %v359 = vpack.c.bf16 %v358, %v357
  %360 = vmatpush.bf16.msra.mxu0 %v313
  %361 = vmatpush.bf16.msra.mxu0 %v312
  %362 = vmatpush.bf16.msra.mxu0 %v311
  %363 = vmatpush.bf16.msra.mxu0 %v310
  %364 = vmatpush.bf16.msra.mxu0 %v309
  %365 = vmatpush.bf16.msra.mxu0 %v308
  %366 = vmatpush.bf16.msra.mxu0 %v307
  %367 = vmatpush.bf16.msra.mxu0 %v306
  %368 = vmatmul.bf16.gmra.mxu0 %v359
  %v369 = vpop.f32.mrf.mxu0
  %v370 = vadd.f32 0.0, %v369
  %v371 = vpop.f32.mrf.mxu0
  %v372 = vadd.f32 0.0, %v371
  %373 = vdwg.mxu0
  %v374 = vadd.f32 %v231, %v370
  %v375 = vadd.f32 %v233, %v372
  %v376 = vtanh.pop %v374
  %v377 = vtanh.pop %v375
  %v378 = vpack.c.bf16 %v377, %v376
  %379 = vmatpush.bf16.msra.mxu0 %v313
  %380 = vmatpush.bf16.msra.mxu0 %v312
  %381 = vmatpush.bf16.msra.mxu0 %v311
  %382 = vmatpush.bf16.msra.mxu0 %v310
  %383 = vmatpush.bf16.msra.mxu0 %v309
  %384 = vmatpush.bf16.msra.mxu0 %v308
  %385 = vmatpush.bf16.msra.mxu0 %v307
  %386 = vmatpush.bf16.msra.mxu0 %v306
  %387 = vmatmul.bf16.gmra.mxu0 %v378
  %v388 = vpop.f32.mrf.mxu0
  %v389 = vadd.f32 0.0, %v388
  %v390 = vpop.f32.mrf.mxu0
  %v391 = vadd.f32 0.0, %v390
  %392 = vdwg.mxu0
  %v393 = vadd.f32 %v236, %v389
  %v394 = vadd.f32 %v238, %v391
  %v395 = vtanh.pop %v393
  %v396 = vtanh.pop %v394
  %v397 = vpack.c.bf16 %v396, %v395
  %398 = vmatpush.bf16.msra.mxu0 %v313
  %399 = vmatpush.bf16.msra.mxu0 %v312
  %400 = vmatpush.bf16.msra.mxu0 %v311
  %401 = vmatpush.bf16.msra.mxu0 %v310
  %402 = vmatpush.bf16.msra.mxu0 %v309
  %403 = vmatpush.bf16.msra.mxu0 %v308
  %404 = vmatpush.bf16.msra.mxu0 %v307
  %405 = vmatpush.bf16.msra.mxu0 %v306
  %406 = vmatmul.bf16.gmra.mxu0 %v397
  %v407 = vpop.f32.mrf.mxu0
  %v408 = vadd.f32 0.0, %v407
  %v409 = vpop.f32.mrf.mxu0
  %v410 = vadd.f32 0.0, %v409
  %411 = vdwg.mxu0
  %v412 = vadd.f32 %v241, %v408
  %v413 = vadd.f32 %v243, %v410
  %v414 = vtanh.pop %v412
  %v415 = vtanh.pop %v413
  %v416 = vpack.c.bf16 %v415, %v414
  %417 = vmatpush.bf16.msra.mxu0 %v313
  %418 = vmatpush.bf16.msra.mxu0 %v312
  %419 = vmatpush.bf16.msra.mxu0 %v311
  %420 = vmatpush.bf16.msra.mxu0 %v310
  %421 = vmatpush.bf16.msra.mxu0 %v309
  %422 = vmatpush.bf16.msra.mxu0 %v308
  %423 = vmatpush.bf16.msra.mxu0 %v307
  %424 = vmatpush.bf16.msra.mxu0 %v306
  %425 = vmatmul.bf16.gmra.mxu0 %v416
  %v426 = vpop.f32.mrf.mxu0
  %v427 = vadd.f32 0.0, %v426
  %v428 = vpop.f32.mrf.mxu0
  %v429 = vadd.f32 0.0, %v428
  %430 = vdwg.mxu0
  %v431 = vadd.f32 %v246, %v427
  %v432 = vadd.f32 %v248, %v429
  %v433 = vtanh.pop %v431
  %v434 = vtanh.pop %v432
  %v435 = vpack.c.bf16 %v434, %v433
  %436 = vmatpush.bf16.msra.mxu0 %v313
  %437 = vmatpush.bf16.msra.mxu0 %v312
  %438 = vmatpush.bf16.msra.mxu0 %v311
  %439 = vmatpush.bf16.msra.mxu0 %v310
  %440 = vmatpush.bf16.msra.mxu0 %v309
  %441 = vmatpush.bf16.msra.mxu0 %v308
  %442 = vmatpush.bf16.msra.mxu0 %v307
  %443 = vmatpush.bf16.msra.mxu0 %v306
  %444 = vmatmul.bf16.gmra.mxu0 %v435
  %v445 = vpop.f32.mrf.mxu0
  %v446 = vadd.f32 0.0, %v445
  %v447 = vpop.f32.mrf.mxu0
  %v448 = vadd.f32 0.0, %v447
  %449 = vdwg.mxu0
  %v450 = vadd.f32 %v251, %v446
  %v451 = vadd.f32 %v253, %v448
  %v452 = vtanh.pop %v450
  %v453 = vtanh.pop %v451
  %v454 = vpack.c.bf16 %v453, %v452
  %v455 = vld [vmem:[%s3] sm:$0xf]
  %v456 = vld [vmem:[%s3 + $0x4] sm:$0xf]
  %v457 = vld [vmem:[%s3 + $0x8] sm:$0xf]
  %v458 = vld [vmem:[%s3 + $0xc] sm:$0xf]
  %v459 = vld [vmem:[%s3 + $0x10] sm:$0xf]
  %v460 = vld [vmem:[%s3 + $0x14] sm:$0xf]
  %v461 = vld [vmem:[%s3 + $0x18] sm:$0xf]
  %v462 = vld [vmem:[%s3 + $0x1c] sm:$0xf]
  %v463 = vld [vmem:[%s3 + $0x20] sm:$0xf]
  %v464 = vld [vmem:[%s3 + $0x24] sm:$0xf]
  %v465 = vld [vmem:[%s3 + $0x28] sm:$0xf]
  %v466 = vld [vmem:[%s3 + $0x2c] sm:$0xf]
  %v467 = vld [vmem:[%s3 + $0x30] sm:$0xf]
  %v468 = vld [vmem:[%s3 + $0x34] sm:$0xf]
  %v469 = vld [vmem:[%s3 + $0x38] sm:$0xf]
  %v470 = vld [vmem:[%s3 + $0x3c] sm:$0xf]
  %v471 = vld [vmem:[%s4] sm:$0x1]
  %v473 = vperm.slane %v471, 0
  %v491 = vunpack.c.l.b16 %v455
  %v492 = vunpack.c.l.b16 %v456
  %v493 = vunpack.c.l.b16 %v457
  %v494 = vunpack.c.l.b16 %v458
  %v495 = vunpack.c.l.b16 %v459
  %v496 = vunpack.c.l.b16 %v460
  %v497 = vunpack.c.l.b16 %v461
  %v498 = vunpack.c.l.b16 %v462
  %v499 = vunpack.c.l.b16 %v463
  %v500 = vunpack.c.l.b16 %v464
  %v501 = vunpack.c.l.b16 %v465
  %v502 = vunpack.c.l.b16 %v466
  %v503 = vunpack.c.l.b16 %v467
  %v504 = vunpack.c.l.b16 %v468
  %v505 = vunpack.c.l.b16 %v469
  %v506 = vunpack.c.l.b16 %v470
  %v507 = vpack.c.b16 %v492, %v491
  %v508 = vpack.c.b16 %v494, %v493
  %v509 = vpack.c.b16 %v496, %v495
  %v510 = vpack.c.b16 %v498, %v497
  %v511 = vpack.c.b16 %v500, %v499
  %v512 = vpack.c.b16 %v502, %v501
  %v513 = vpack.c.b16 %v504, %v503
  %v514 = vpack.c.b16 %v506, %v505
  %523 = vmatpush.bf16.msra.mxu0 %v514
  %524 = vmatpush.bf16.msra.mxu0 %v513
  %525 = vmatpush.bf16.msra.mxu0 %v512
  %526 = vmatpush.bf16.msra.mxu0 %v511
  %527 = vmatpush.bf16.msra.mxu0 %v510
  %528 = vmatpush.bf16.msra.mxu0 %v509
  %529 = vmatpush.bf16.msra.mxu0 %v508
  %530 = vmatpush.bf16.msra.mxu0 %v507
  %531 = vmatmul.bf16.gmra.mxu0 %v454
  %v532 = vpop.f32.mrf.mxu0
  %v533 = vadd.f32 %v473, %v532
  %v534 = vpop.f32.mrf.mxu0
  %v535 = vadd.f32 %v473, %v534
  %536 = vdwg.mxu0
  %537 = vst [vmem:[%s5] sm:$0xff] %v533
  %538 = vst [vmem:[%s5 + $0x8] sm:$0xff] %v535
  // Predicated region
  $region22: #{rnn_forward.1} parent=0 // pred_check
    _
  $region23: #{rnn_forward.1} parent=0 // pred_check_branch
    %540 = sbr.rel (0) target = $region25
  $region24: #{rnn_forward.1} parent=0 // pred_region
    _
  $region25: #{rnn_forward.1} parent=0 // pred_fallthru
    _
  // Predicated region
  $region26: #{rnn_forward.1} parent=0 // pred_check
    _
  $region27: #{rnn_forward.1} parent=0 // pred_check_branch
    %542 = sbr.rel (0) target = $region29
  $region28: #{rnn_forward.1} parent=0 // pred_region
    _
  $region29: #{rnn_forward.1} parent=0 // pred_fallthru
    _

</llo_original>
